<compile_context>
chip_gen: v7x
topology: tpu7x:2x2x1
jax: 0.10.0
libtpu: 0.0.40
codegen_flags: <defaults>
</compile_context>

<pallas_src>
import jax
import jax.numpy as jnp
from jax.experimental import pallas as pl
from jax.experimental.pallas import tpu as pltpu

LANE = 128
TT_TARGET = 8192  # horizon rows per tile; ~7 MiB VMEM working set -> safe on v5e/v6e/v7x


def _round_up(v, m):
    return ((v + m - 1) // m) * m


def _value_mlp_kernel(xT_ref, bias_ref, w1T_ref, w2r_ref, o_ref):
    # One (batch b, horizon-tile j) program.
    #   xT_ref  : [1, D,   TT] f32  trajectory rows of batch b, transposed (rows on lanes)
    #   bias_ref: [1, HID, 1 ] f32  per-batch folded hidden bias (temb[t_b] @ W1 + b1)
    #   w1T_ref : [HID, D]     f32  first-layer weights, transposed (grid-resident)
    #   w2r_ref : [1, HID]     f32  value head as a row (grid-resident)
    #   o_ref   : [1, 1, TT]   f32  per-row value, lane dense (unmasked stores)
    h = jnp.dot(w1T_ref[...], xT_ref[0],
                preferred_element_type=jnp.float32)          # MXU: [HID, TT]
    h = jax.nn.gelu(h + bias_ref[0])                         # VPU/EUP (tanh on EUP)
    # Value head on the idle MXU instead of a VPU multiply + XLU reduce.
    o_ref[0] = jnp.dot(w2r_ref[...], h,
                       preferred_element_type=jnp.float32)   # [1, TT], lane dense


def value_guide_forward(x, cond, t, params):
    """ValueGuide.forward: value = model(x, cond, t).squeeze(-1) -> [B, T]."""
    del cond  # API parity with ValueGuide.forward; synthetic value net (like
              # diffuser's ValueFunction) does not consume cond.
    w1, b1, w2, b2, temb_table = params
    B, T, D = x.shape
    HID = w1.shape[1]

    # Fold the time embedding into a per-batch hidden-space bias (tiny [B, HID]):
    #   (x + temb) @ W1 + b1  ==  x @ W1 + (temb @ W1 + b1)
    bias = temb_table[t] @ w1 + b1[None, :]                  # [B, HID] f32
    bias3 = bias[:, :, None].astype(jnp.float32)             # [B, HID, 1]

    # Balanced tiling over the horizon axis (rows -> 128-wide lane axis).
    # NOTE: T is padded to at least one 128-lane tile per batch, so very short
    # horizons (T << 128) carry some padded compute; fine at these sizes.
    T_pad = _round_up(T, LANE)
    n_tiles = pl.cdiv(T_pad, TT_TARGET)
    TT = _round_up(pl.cdiv(T_pad, n_tiles), LANE)
    T_pad = n_tiles * TT

    # Layout plumbing: rows -> lanes (single transpose+pad pass over x).
    xT = jnp.swapaxes(x, 1, 2).astype(jnp.float32)           # [B, D, T]
    if T_pad > T:
        xT = jnp.pad(xT, ((0, 0), (0, 0), (0, T_pad - T)))
    w1T = w1.T.astype(jnp.float32)                           # [HID, D]
    w2r = w2.reshape(1, HID).astype(jnp.float32)             # [1, HID]

    M_pad = B * T_pad
    flops = 2 * M_pad * D * HID + 2 * M_pad * HID + 4 * M_pad * HID
    bytes_accessed = (M_pad * D * 4) + (HID * D * 4) + (B * HID * 4) \
                     + (HID * 4) + (M_pad * 4)

    out = pl.pallas_call(
        _value_mlp_kernel,
        out_shape=jax.ShapeDtypeStruct((B, 1, T_pad), jnp.float32),
        grid=(B, n_tiles),
        in_specs=[
            pl.BlockSpec((1, D, TT), lambda b, j: (b, 0, j)),    # x tile
            pl.BlockSpec((1, HID, 1), lambda b, j: (b, 0, 0)),   # folded bias (per batch)
            pl.BlockSpec((HID, D), lambda b, j: (0, 0)),         # W1^T (resident)
            pl.BlockSpec((1, HID), lambda b, j: (0, 0)),         # w2 row (resident)
        ],
        out_specs=pl.BlockSpec((1, 1, TT), lambda b, j: (b, 0, j)),
        compiler_params=pltpu.CompilerParams(
            dimension_semantics=("parallel", "parallel"),        # megacore on v7x
            vmem_limit_bytes=32 * 1024 * 1024,                   # explicit for v5e
        ),
        cost_estimate=pl.CostEstimate(
            flops=flops,
            transcendentals=M_pad * HID,                         # gelu tanh
            bytes_accessed=bytes_accessed,
        ),
    )(xT, bias3, w1T, w2r)

    # b2 added outside the hot path; padded rows are sliced off here.
    return out[:, 0, :T] + b2


def init_params(key, d_in, hidden, n_timesteps):
    k1, k2, k3, k4, k5 = jax.random.split(key, 5)
    w1 = jax.random.normal(k1, (d_in, hidden), jnp.float32) / jnp.sqrt(d_in)
    b1 = jax.random.normal(k2, (hidden,), jnp.float32) * 0.01
    w2 = jax.random.normal(k3, (hidden,), jnp.float32) / jnp.sqrt(hidden)
    b2 = jax.random.normal(k4, (), jnp.float32) * 0.01
    temb = jax.random.normal(k5, (n_timesteps, d_in), jnp.float32) * 0.1
    return w1, b1, w2, b2, temb


if __name__ == "__main__":
    # Small shapes consistent with a trajectory value guide:
    # batch=2, horizon=8, transition_dim=32, hidden=128, 100 diffusion steps.
    B, T, D, HID, NT = 2, 8, 32, 128, 100

    key = jax.random.PRNGKey(0)
    kx, kc, kt, kp = jax.random.split(key, 4)
    x = jax.random.normal(kx, (B, T, D), jnp.float32)
    cond = jax.random.normal(kc, (B, D), jnp.float32)   # API parity; unused by value net
    t = jax.random.randint(kt, (B,), 0, NT, jnp.int32)
    params = init_params(kp, D, HID, NT)

    value = jax.jit(value_guide_forward)(x, cond, t, params)
    jax.block_until_ready(value)

    # Pure-JAX f32 reference in the original module's formulation.
    w1, b1, w2, b2, temb = params
    xc = x + temb[t][:, None, :]
    h = jax.nn.gelu(jnp.einsum('btd,dh->bth', xc, w1) + b1)
    ref = jnp.einsum('bth,h->bt', h, w2) + b2

    assert value.shape == (B, T)
    max_err = jnp.max(jnp.abs(value - ref))
    assert jnp.allclose(value, ref, atol=1e-3, rtol=1e-3), max_err

    # TODO(synk): ValueGuide.gradients(x, cond, t) (autograd-based guidance) is
    # not part of the forward pass; it would require a custom_vjp / hand-written
    # backward kernel around this pallas_call rather than plain jax.grad.
    print("KERNEL_OK")
</pallas_src>

<mosaic_0001>
module attributes {stable_mosaic.version = 11 : i64} {
  func.func @_value_mlp_kernel(%arg0: i32, %arg1: i32, %arg2: memref<1x32x128xf32, #tpu.memory_space<vmem>>, %arg3: memref<1x128x1xf32, #tpu.memory_space<vmem>>, %arg4: memref<128x32xf32, #tpu.memory_space<vmem>>, %arg5: memref<1x128xf32, #tpu.memory_space<vmem>>, %arg6: memref<1x1x128xf32, #tpu.memory_space<vmem>>) attributes {dimension_semantics = [#tpu.dimension_semantics<parallel>, #tpu.dimension_semantics<parallel>], iteration_bounds = array<i64: 2, 1>, scalar_prefetch = 0 : i64, scratch_operands = 0 : i64, tpu.core_type = #tpu.core_type<tc>, window_params = [{transform_indices = @transform_0, window_bounds = array<i64: 1, 32, 128>}, {transform_indices = @transform_1, window_bounds = array<i64: 1, 128, 1>}, {pipeline_mode = #tpu.pipeline_mode<synchronous>, transform_indices = @transform_2, window_bounds = array<i64: 128, 32>}, {pipeline_mode = #tpu.pipeline_mode<synchronous>, transform_indices = @transform_3, window_bounds = array<i64: 1, 128>}, {transform_indices = @transform_4, window_bounds = array<i64: 1, 1, 128>}]} {
    %c0 = arith.constant 0 : index
    %c0_0 = arith.constant 0 : index
    %0 = vector.load %arg4[%c0, %c0_0] : memref<128x32xf32, #tpu.memory_space<vmem>>, vector<128x32xf32>
    %c0_1 = arith.constant 0 : index
    %c0_2 = arith.constant 0 : index
    %c0_3 = arith.constant 0 : index
    %1 = vector.load %arg2[%c0_1, %c0_2, %c0_3] : memref<1x32x128xf32, #tpu.memory_space<vmem>>, vector<1x32x128xf32>
    %2 = vector.shape_cast %1 : vector<1x32x128xf32> to vector<32x128xf32>
    %cst = arith.constant dense<0.000000e+00> : vector<128x128xf32>
    %3 = tpu.matmul %0, %2, %cst {dimension_numbers = #tpu.dot_dimension_numbers<[1], [0], [0], [1], [0, 0, 1, 1], [], []>} : vector<128x32xf32>, vector<32x128xf32>, vector<128x128xf32> -> vector<128x128xf32>
    %c0_4 = arith.constant 0 : index
    %c0_5 = arith.constant 0 : index
    %c0_6 = arith.constant 0 : index
    %4 = vector.load %arg3[%c0_4, %c0_5, %c0_6] : memref<1x128x1xf32, #tpu.memory_space<vmem>>, vector<1x128x1xf32>
    %5 = vector.shape_cast %4 : vector<1x128x1xf32> to vector<128x1xf32>
    %6 = vector.broadcast %5 : vector<128x1xf32> to vector<128x128xf32>
    %7 = arith.addf %3, %6 : vector<128x128xf32>
    %8 = arith.mulf %7, %7 : vector<128x128xf32>
    %9 = arith.mulf %7, %8 : vector<128x128xf32>
    %cst_7 = arith.constant 4.471500e-02 : f32
    %10 = vector.broadcast %cst_7 : f32 to vector<128x128xf32>
    %11 = arith.mulf %10, %9 : vector<128x128xf32>
    %12 = arith.addf %7, %11 : vector<128x128xf32>
    %cst_8 = arith.constant 0.797884583 : f32
    %13 = vector.broadcast %cst_8 : f32 to vector<128x128xf32>
    %14 = arith.mulf %13, %12 : vector<128x128xf32>
    %15 = math.tanh %14 : vector<128x128xf32>
    %cst_9 = arith.constant 1.000000e+00 : f32
    %16 = vector.broadcast %cst_9 : f32 to vector<128x128xf32>
    %17 = arith.addf %16, %15 : vector<128x128xf32>
    %cst_10 = arith.constant 5.000000e-01 : f32
    %18 = vector.broadcast %cst_10 : f32 to vector<128x128xf32>
    %19 = arith.mulf %18, %17 : vector<128x128xf32>
    %20 = arith.mulf %7, %19 : vector<128x128xf32>
    %c0_11 = arith.constant 0 : index
    %c0_12 = arith.constant 0 : index
    %21 = vector.load %arg5[%c0_11, %c0_12] : memref<1x128xf32, #tpu.memory_space<vmem>>, vector<1x128xf32>
    %cst_13 = arith.constant dense<0.000000e+00> : vector<1x128xf32>
    %22 = tpu.matmul %21, %20, %cst_13 {dimension_numbers = #tpu.dot_dimension_numbers<[1], [0], [0], [1], [0, 0, 1, 1], [], []>} : vector<1x128xf32>, vector<128x128xf32>, vector<1x128xf32> -> vector<1x128xf32>
    %c0_14 = arith.constant 0 : index
    %c0_15 = arith.constant 0 : index
    %c0_16 = arith.constant 0 : index
    %23 = vector.load %arg6[%c0_14, %c0_15, %c0_16] : memref<1x1x128xf32, #tpu.memory_space<vmem>>, vector<1x1x128xf32>
    %24 = vector.shape_cast %23 : vector<1x1x128xf32> to vector<1x128xf32>
    %25 = vector.shape_cast %22 : vector<1x128xf32> to vector<1x1x128xf32>
    tpu.vector_store %arg6[%c0_14, %c0_15, %c0_16], %25 {strides = array<i32>} : memref<1x1x128xf32, #tpu.memory_space<vmem>>, vector<1x1x128xf32>,
    return
  }
  func.func @transform_0(%arg0: i32, %arg1: i32) -> (i32, i32, i32) {
    %c0_i32 = arith.constant 0 : i32
    %c0_i32_0 = arith.constant 0 : i32
    return %arg0, %c0_i32, %arg1 : i32, i32, i32
  }
  func.func @transform_1(%arg0: i32, %arg1: i32) -> (i32, i32, i32) {
    %c0_i32 = arith.constant 0 : i32
    %c0_i32_0 = arith.constant 0 : i32
    %c0_i32_1 = arith.constant 0 : i32
    return %arg0, %c0_i32, %c0_i32_0 : i32, i32, i32
  }
  func.func @transform_2(%arg0: i32, %arg1: i32) -> (i32, i32) {
    %c0_i32 = arith.constant 0 : i32
    %c0_i32_0 = arith.constant 0 : i32
    %c0_i32_1 = arith.constant 0 : i32
    return %c0_i32, %c0_i32_0 : i32, i32
  }
  func.func @transform_3(%arg0: i32, %arg1: i32) -> (i32, i32) {
    %c0_i32 = arith.constant 0 : i32
    %c0_i32_0 = arith.constant 0 : i32
    %c0_i32_1 = arith.constant 0 : i32
    return %c0_i32, %c0_i32_0 : i32, i32
  }
  func.func @transform_4(%arg0: i32, %arg1: i32) -> (i32, i32, i32) {
    %c0_i32 = arith.constant 0 : i32
    %c0_i32_0 = arith.constant 0 : i32
    return %arg0, %c0_i32, %arg1 : i32, i32, i32
  }
}

</mosaic_0001>

<llo_original>
// kernel: value_guide_forward.1
$region0: #{value_guide_forward.1}
  #allocation0 [shape = 'u32[]', space=smem, size = 0x4, offset = 0x4, fixed_abs, tag = 'smem constant byte address 0x4 - core index']
  #allocation1 [shape = 'u32[144,128]{1,0:T(1,128)}', space=vmem, size = 0x12000, scoped, tag = 'internal scratch']
  %s0 = inlined_call_operand.vmem [shape: f32[2,32,128], index: 0, kind: input, shape index: {}]
  %s1 = inlined_call_operand.vmem [shape: f32[2,128,1], index: 1, kind: input, shape index: {}]
  %s2 = inlined_call_operand.vmem [shape: f32[128,32], index: 2, kind: input, shape index: {}]
  %s3 = inlined_call_operand.vmem [shape: f32[1,128], index: 3, kind: input, shape index: {}]
  %s4 = inlined_call_operand.vmem [shape: f32[2,1,128], index: 4, kind: output, shape index: {}]
  %s5 = sld [smem:[#allocation0]]
  $region49: #{value_guide_forward.1} parent=0
    _
  %s7 = ssub.s32 1, %s5
  %s8 = scalar_select 0, %s7, %s5
  loop: start=0, step=1, limit=4
  $region2: #{value_guide_forward.1} parent=0 // loop_pre_header
    _
  $region3: #{value_guide_forward.1} parent=0 // loop_header
    %s10 = sphi 0, %s14
    %p11 = scmp.ge.s32.totalorder %s10, 4
    %s17 = sphi 0, %s29
    %s18 = sphi 0, %s25
    %s19 = sphi 0, %s17
    %s20 = sphi 0, %s18
    %s21 = sphi 0, %s19
    %s22 = sphi 0, %s20
    %s34 = sphi 0, %s36
    %s37 = sphi 0, %s34
    %s38 = sphi 0, %s37
    %s54 = sphi 0, %s38
    %s60 = sphi 0, %s62
    %s63 = sphi 0, %s60
    %s64 = sphi 0, %s63
    %s80 = sphi 0, %s64
    %s84 = sphi 0, %s84
    %s86 = sphi 0, %s84
    %s87 = sphi 0, %s86
    %s101 = sphi 0, %s87
    %s105 = sphi 0, %s105
    %s107 = sphi 0, %s105
    %s108 = sphi 0, %s107
    %s122 = sphi 0, %s108
    %s130 = sphi 0, %s132
    %s133 = sphi 0, %s130
    %s134 = sphi 0, %s133
    %s150 = sphi 0, %s134
  $region4: #{value_guide_forward.1} parent=0 // loop_header_branch
    %13 = sbr.rel (%p11) target = $region8
  $region5: #{value_guide_forward.1} parent=0 // loop_body
    %s15 = ssub.s32 %s10, 1
    %s16 = ssub.s32 %s10, 2
    %s23 = sadd.s32 1, %s18
    %p24 = scmp.ge.s32.totalorder %s23, 1
    %s25 = scalar_select %p24, 0, %s23
    %s26 = sadd.s32 1, %s17
    %s27 = scalar_select %p24, %s26, %s17
    %p28 = scmp.ge.s32.totalorder %s27, 2
    %s29 = scalar_select %p28, 0, %s27
    %s30 = ssub.s32 %s17, %s29
    %s31 = ssub.s32 %s18, %s25
    %s32 = sor.u32 %s30, %s31
    %p33 = scmp.eq.s32.totalorder %s32, 0
    %s35 = sadd.s32 %s34, 1
    %s36 = scalar_select %p33, %s34, %s35
    %p39 = pneg %p33
    %p40 = scmp.eq.s32.totalorder %s10, 1
    %p41 = por %p39, %p40
    %p42 = scmp.ne.s32.totalorder %s34, %s37
    %p43 = scmp.eq.s32.totalorder %s10, 0
    %p44 = por %p42, %p43
    %p45 = scmp.ne.s32.totalorder %s34, %s37
    %p46 = scmp.eq.s32.totalorder %s15, 1
    %p47 = por %p45, %p46
    %p48 = scmp.ne.s32.totalorder %s37, %s38
    %p49 = scmp.eq.s32.totalorder %s15, 0
    %p50 = por %p48, %p49
    %p51 = scmp.ne.s32.totalorder %s37, %s38
    %p52 = scmp.eq.s32.totalorder %s16, 1
    %p53 = por %p51, %p52
    %p55 = scmp.ne.s32.totalorder %s38, %s54
    %p56 = scmp.eq.s32.totalorder %s16, 0
    %p57 = por %p55, %p56
    %s58 = ssub.s32 %s17, %s29
    %p59 = scmp.eq.s32.totalorder %s58, 0
    %s61 = sadd.s32 %s60, 1
    %s62 = scalar_select %p59, %s60, %s61
    %p65 = pneg %p59
    %p66 = scmp.eq.s32.totalorder %s10, 1
    %p67 = por %p65, %p66
    %p68 = scmp.ne.s32.totalorder %s60, %s63
    %p69 = scmp.eq.s32.totalorder %s10, 0
    %p70 = por %p68, %p69
    %p71 = scmp.ne.s32.totalorder %s60, %s63
    %p72 = scmp.eq.s32.totalorder %s15, 1
    %p73 = por %p71, %p72
    %p74 = scmp.ne.s32.totalorder %s63, %s64
    %p75 = scmp.eq.s32.totalorder %s15, 0
    %p76 = por %p74, %p75
    %p77 = scmp.ne.s32.totalorder %s63, %s64
    %p78 = scmp.eq.s32.totalorder %s16, 1
    %p79 = por %p77, %p78
    %p81 = scmp.ne.s32.totalorder %s64, %s80
    %p82 = scmp.eq.s32.totalorder %s16, 0
    %p83 = por %p81, %p82
    %s85 = sadd.s32 %s84, 1
    %p88 = scmp.eq.s32.totalorder %s10, 1
    %p89 = scmp.ne.s32.totalorder %s84, %s86
    %p90 = scmp.eq.s32.totalorder %s10, 0
    %p91 = por %p89, %p90
    %p92 = scmp.ne.s32.totalorder %s84, %s86
    %p93 = scmp.eq.s32.totalorder %s15, 1
    %p94 = por %p92, %p93
    %p95 = scmp.ne.s32.totalorder %s86, %s87
    %p96 = scmp.eq.s32.totalorder %s15, 0
    %p97 = por %p95, %p96
    %p98 = scmp.ne.s32.totalorder %s86, %s87
    %p99 = scmp.eq.s32.totalorder %s16, 1
    %p100 = por %p98, %p99
    %p102 = scmp.ne.s32.totalorder %s87, %s101
    %p103 = scmp.eq.s32.totalorder %s16, 0
    %p104 = por %p102, %p103
    %s106 = sadd.s32 %s105, 1
    %p109 = scmp.eq.s32.totalorder %s10, 1
    %p110 = scmp.ne.s32.totalorder %s105, %s107
    %p111 = scmp.eq.s32.totalorder %s10, 0
    %p112 = por %p110, %p111
    %p113 = scmp.ne.s32.totalorder %s105, %s107
    %p114 = scmp.eq.s32.totalorder %s15, 1
    %p115 = por %p113, %p114
    %p116 = scmp.ne.s32.totalorder %s107, %s108
    %p117 = scmp.eq.s32.totalorder %s15, 0
    %p118 = por %p116, %p117
    %p119 = scmp.ne.s32.totalorder %s107, %s108
    %p120 = scmp.eq.s32.totalorder %s16, 1
    %p121 = por %p119, %p120
    %p123 = scmp.ne.s32.totalorder %s108, %s122
    %p124 = scmp.eq.s32.totalorder %s16, 0
    %p125 = por %p123, %p124
    %s126 = ssub.s32 %s17, %s29
    %s127 = ssub.s32 %s18, %s25
    %s128 = sor.u32 %s126, %s127
    %p129 = scmp.eq.s32.totalorder %s128, 0
    %s131 = sadd.s32 %s130, 1
    %s132 = scalar_select %p129, %s130, %s131
    %p135 = pneg %p129
    %p136 = scmp.eq.s32.totalorder %s10, 1
    %p137 = por %p135, %p136
    %p138 = scmp.ne.s32.totalorder %s130, %s133
    %p139 = scmp.eq.s32.totalorder %s10, 0
    %p140 = por %p138, %p139
    %p141 = scmp.ne.s32.totalorder %s130, %s133
    %p142 = scmp.eq.s32.totalorder %s15, 1
    %p143 = por %p141, %p142
    %p144 = scmp.ne.s32.totalorder %s133, %s134
    %p145 = scmp.eq.s32.totalorder %s15, 0
    %p146 = por %p144, %p145
    %p147 = scmp.ne.s32.totalorder %s133, %s134
    %p148 = scmp.eq.s32.totalorder %s16, 1
    %p149 = por %p147, %p148
    %p151 = scmp.ne.s32.totalorder %s134, %s150
    %p152 = scmp.eq.s32.totalorder %s16, 0
    %p153 = por %p151, %p152
    %p154 = scmp.le.s32.totalorder 1, %s10
    %p155 = scmp.lt.s32.totalorder %s10, 3
    %p156 = pnand %p154, %p155
    %p157 = pneg %p156
    // Predicated region
    $region9: #{value_guide_forward.1} parent=5 // pred_check
      _
    $region10: #{value_guide_forward.1} parent=5 // pred_check_branch
      %159 = sbr.rel (%p156) target = $region12
    $region11: #{value_guide_forward.1} parent=5 // pred_region
      %s160 = ssub.s32 %s10, 1
      // Predicated region
      $region13: #{value_guide_forward.1} parent=11 // pred_check
        %p161 = pneg %p97
      $region14: #{value_guide_forward.1} parent=11 // pred_check_branch
        %163 = sbr.rel (%p161) target = $region16
      $region15: #{value_guide_forward.1} parent=11 // pred_region
        _
      $region16: #{value_guide_forward.1} parent=11 // pred_fallthru
        _
      // Predicated region
      $region17: #{value_guide_forward.1} parent=11 // pred_check
        %p164 = pneg %p118
      $region18: #{value_guide_forward.1} parent=11 // pred_check_branch
        %166 = sbr.rel (%p164) target = $region20
      $region19: #{value_guide_forward.1} parent=11 // pred_region
        _
      $region20: #{value_guide_forward.1} parent=11 // pred_fallthru
        _
    $region12: #{value_guide_forward.1} parent=5 // pred_fallthru
      _
    %p167 = scmp.lt.s32.totalorder %s10, 2
    // Predicated region
    $region21: #{value_guide_forward.1} parent=5 // pred_check
      %p168 = pneg %p167
    $region22: #{value_guide_forward.1} parent=5 // pred_check_branch
      %170 = sbr.rel (%p168) target = $region24
    $region23: #{value_guide_forward.1} parent=5 // pred_region
      // Predicated region
      $region25: #{value_guide_forward.1} parent=23 // pred_check
        %p171 = pneg %p44
      $region26: #{value_guide_forward.1} parent=23 // pred_check_branch
        %173 = sbr.rel (%p171) target = $region28
      $region27: #{value_guide_forward.1} parent=23 // pred_region
        %p174 = scmp.lt.s32.totalorder %s17, 1
        %s175 = scalar_select %p174, %s17, 1
        %p176 = scmp.lt.s32.totalorder %s18, 0
        %s177 = scalar_select %p176, %s18, 0
        %s178 = smul.addr %s175, 4
        %s179 = sadd.s32 %s177, %s178
        %s180 = smul.addr %s179, 8
        %s181 = scalar_lea.vmem %s0, %s180
      $region28: #{value_guide_forward.1} parent=23 // pred_fallthru
        _
      // Predicated region
      $region29: #{value_guide_forward.1} parent=23 // pred_check
        %p182 = pneg %p70
      $region30: #{value_guide_forward.1} parent=23 // pred_check_branch
        %184 = sbr.rel (%p182) target = $region32
      $region31: #{value_guide_forward.1} parent=23 // pred_region
        %p185 = scmp.lt.s32.totalorder %s17, 1
        %s186 = scalar_select %p185, %s17, 1
        %s187 = smul.addr %s186, 16
        %s188 = smul.addr %s187, 8
        %s189 = scalar_lea.vmem %s1, %s188
      $region32: #{value_guide_forward.1} parent=23 // pred_fallthru
        _
    $region24: #{value_guide_forward.1} parent=5 // pred_fallthru
      _
    %p190 = scmp.le.s32.totalorder 1, %s10
    %p191 = scmp.lt.s32.totalorder %s10, 3
    %p192 = pnand %p190, %p191
    %p193 = pneg %p192
    // Predicated region
    $region33: #{value_guide_forward.1} parent=5 // pred_check
      _
    $region34: #{value_guide_forward.1} parent=5 // pred_check_branch
      %195 = sbr.rel (%p192) target = $region36
    $region35: #{value_guide_forward.1} parent=5 // pred_region
      %s196 = ssub.s32 %s10, 1
      %p197 = scmp.lt.s32.totalorder %s19, 1
      %s198 = scalar_select %p197, %s19, 1
      %p199 = scmp.lt.s32.totalorder %s20, 0
      %s200 = scalar_select %p199, %s20, 0
      %s201 = smul.addr %s198, 4
      %s202 = sadd.s32 %s200, %s201
      %s203 = smul.addr %s202, 8
      %s204 = scalar_lea.vmem %s0, %s203
      %p205 = pneg %p50
      %p206 = pneg %p47
      %p207 = scmp.lt.s32.totalorder %s19, 1
      %s208 = scalar_select %p207, %s19, 1
      %s209 = smul.addr %s208, 16
      %s210 = smul.addr %s209, 8
      %s211 = scalar_lea.vmem %s1, %s210
      %p212 = pneg %p76
      %p213 = pneg %p73
      %p214 = pneg %p97
      %p215 = pneg %p94
      %p216 = pneg %p118
      %p217 = pneg %p115
      %p218 = pneg %p146
      %p219 = pneg %p143
      %p220 = scmp.lt.s32.totalorder %s19, 1
      %s221 = scalar_select %p220, %s19, 1
      %p222 = scmp.lt.s32.totalorder %s20, 0
      %s223 = scalar_select %p222, %s20, 0
      %s224 = sadd.s32 %s223, %s221
      %s225 = scalar_lea.vmem %s4, %s224
      %p226 = scmp.lt.s32.totalorder %s19, 1
      %s227 = scalar_select %p226, %s19, 1
      %p228 = scmp.lt.s32.totalorder %s20, 0
      %s229 = scalar_select %p228, %s20, 0
      %s230 = smul.addr %s227, 4
      %s231 = sadd.s32 %s229, %s230
      %s232 = smul.addr %s231, 8
      %s233 = scalar_lea.vmem %s0, %s232
      %p234 = scmp.lt.s32.totalorder %s19, 1
      %s235 = scalar_select %p234, %s19, 1
      %s236 = smul.addr %s235, 16
      %s237 = smul.addr %s236, 8
      %s238 = scalar_lea.vmem %s1, %s237
      %p239 = scmp.lt.s32.totalorder %s19, 1
      %s240 = scalar_select %p239, %s19, 1
      %p241 = scmp.lt.s32.totalorder %s20, 0
      %s242 = scalar_select %p241, %s20, 0
      %s243 = sadd.s32 %s242, %s240
      %s244 = scalar_lea.vmem %s4, %s243
      %v245 = vld [vmem:[%s2] sm:$0xff]
      %v246 = vld [vmem:[%s2 + $0x8] sm:$0xff]
      %v247 = vld [vmem:[%s2 + $0x10] sm:$0xff]
      %v248 = vld [vmem:[%s2 + $0x18] sm:$0xff]
      %v249 = vld [vmem:[%s2 + $0x20] sm:$0xff]
      %v250 = vld [vmem:[%s2 + $0x28] sm:$0xff]
      %v251 = vld [vmem:[%s2 + $0x30] sm:$0xff]
      %v252 = vld [vmem:[%s2 + $0x38] sm:$0xff]
      %v253 = vld [vmem:[%s2 + $0x40] sm:$0xff]
      %v254 = vld [vmem:[%s2 + $0x48] sm:$0xff]
      %v255 = vld [vmem:[%s2 + $0x50] sm:$0xff]
      %v256 = vld [vmem:[%s2 + $0x58] sm:$0xff]
      %v257 = vld [vmem:[%s2 + $0x60] sm:$0xff]
      %v258 = vld [vmem:[%s2 + $0x68] sm:$0xff]
      %v259 = vld [vmem:[%s2 + $0x70] sm:$0xff]
      %v260 = vld [vmem:[%s2 + $0x78] sm:$0xff]
      %v261 = vld [vmem:[%s233] sm:$0xff]
      %v262 = vld [vmem:[%s233 + $0x8] sm:$0xff]
      %v263 = vld [vmem:[%s233 + $0x10] sm:$0xff]
      %v264 = vld [vmem:[%s233 + $0x18] sm:$0xff]
      %v265 = vld [vmem:[%s238] sm:$0xff]
      %v266 = vld [vmem:[%s238 + $0x8] sm:$0xff]
      %v267 = vld [vmem:[%s238 + $0x10] sm:$0xff]
      %v268 = vld [vmem:[%s238 + $0x18] sm:$0xff]
      %v269 = vld [vmem:[%s238 + $0x20] sm:$0xff]
      %v270 = vld [vmem:[%s238 + $0x28] sm:$0xff]
      %v271 = vld [vmem:[%s238 + $0x30] sm:$0xff]
      %v272 = vld [vmem:[%s238 + $0x38] sm:$0xff]
      %v273 = vld [vmem:[%s238 + $0x40] sm:$0xff]
      %v274 = vld [vmem:[%s238 + $0x48] sm:$0xff]
      %v275 = vld [vmem:[%s238 + $0x50] sm:$0xff]
      %v276 = vld [vmem:[%s238 + $0x58] sm:$0xff]
      %v277 = vld [vmem:[%s238 + $0x60] sm:$0xff]
      %v278 = vld [vmem:[%s238 + $0x68] sm:$0xff]
      %v279 = vld [vmem:[%s238 + $0x70] sm:$0xff]
      %v280 = vld [vmem:[%s238 + $0x78] sm:$0xff]
      %282 = vset.pattern.permute.xlu0 0
      %283 = vperm.xlu0 %282, %v265
      %v284 = vpop.permute.xlu0 %283
      %287 = vset.pattern.permute.xlu0 0
      %288 = vperm.xlu0 %287, %v266
      %v289 = vpop.permute.xlu0 %288
      %292 = vset.pattern.permute.xlu0 0
      %293 = vperm.xlu0 %292, %v267
      %v294 = vpop.permute.xlu0 %293
      %297 = vset.pattern.permute.xlu0 0
      %298 = vperm.xlu0 %297, %v268
      %v299 = vpop.permute.xlu0 %298
      %302 = vset.pattern.permute.xlu0 0
      %303 = vperm.xlu0 %302, %v269
      %v304 = vpop.permute.xlu0 %303
      %307 = vset.pattern.permute.xlu0 0
      %308 = vperm.xlu0 %307, %v270
      %v309 = vpop.permute.xlu0 %308
      %312 = vset.pattern.permute.xlu0 0
      %313 = vperm.xlu0 %312, %v271
      %v314 = vpop.permute.xlu0 %313
      %317 = vset.pattern.permute.xlu0 0
      %318 = vperm.xlu0 %317, %v272
      %v319 = vpop.permute.xlu0 %318
      %322 = vset.pattern.permute.xlu0 0
      %323 = vperm.xlu0 %322, %v273
      %v324 = vpop.permute.xlu0 %323
      %327 = vset.pattern.permute.xlu0 0
      %328 = vperm.xlu0 %327, %v274
      %v329 = vpop.permute.xlu0 %328
      %332 = vset.pattern.permute.xlu0 0
      %333 = vperm.xlu0 %332, %v275
      %v334 = vpop.permute.xlu0 %333
      %337 = vset.pattern.permute.xlu0 0
      %338 = vperm.xlu0 %337, %v276
      %v339 = vpop.permute.xlu0 %338
      %342 = vset.pattern.permute.xlu0 0
      %343 = vperm.xlu0 %342, %v277
      %v344 = vpop.permute.xlu0 %343
      %347 = vset.pattern.permute.xlu0 0
      %348 = vperm.xlu0 %347, %v278
      %v349 = vpop.permute.xlu0 %348
      %352 = vset.pattern.permute.xlu0 0
      %353 = vperm.xlu0 %352, %v279
      %v354 = vpop.permute.xlu0 %353
      %357 = vset.pattern.permute.xlu0 0
      %358 = vperm.xlu0 %357, %v280
      %v359 = vpop.permute.xlu0 %358
      %vm361 = vcmask 261120
      %v363 = vsel %vm361, %v245, 0
      %v366 = vsel %vm361, %v246, 0
      %v369 = vsel %vm361, %v247, 0
      %v372 = vsel %vm361, %v248, 0
      %v375 = vsel %vm361, %v249, 0
      %v378 = vsel %vm361, %v250, 0
      %v381 = vsel %vm361, %v251, 0
      %v384 = vsel %vm361, %v252, 0
      %v387 = vsel %vm361, %v253, 0
      %v390 = vsel %vm361, %v254, 0
      %v393 = vsel %vm361, %v255, 0
      %v396 = vsel %vm361, %v256, 0
      %v399 = vsel %vm361, %v257, 0
      %v402 = vsel %vm361, %v258, 0
      %v405 = vsel %vm361, %v259, 0
      %v408 = vsel %vm361, %v260, 0
      %410 = vmatprep.subr.mxu0 0.0
      %411 = vmatpush1.msra.mxu0 %v261
      %412 = vmatprep.subr.mxu0 0.0
      %413 = vmatpush1.msra.mxu0 %v262
      %414 = vmatprep.subr.mxu0 0.0
      %415 = vmatpush1.msra.mxu0 %v263
      %416 = vmatprep.subr.mxu0 0.0
      %417 = vmatpush1.msra.mxu0 %v264
      %418 = vmatprep.subr.mxu0 0.0
      %419 = vmatpush1.msra.mxu0 0.0
      %420 = vmatprep.subr.mxu0 0.0
      %421 = vmatpush1.msra.mxu0 0.0
      %422 = vmatprep.subr.mxu0 0.0
      %423 = vmatpush1.msra.mxu0 0.0
      %424 = vmatprep.subr.mxu0 0.0
      %425 = vmatpush1.msra.mxu0 0.0
      %426 = vmatprep.subr.mxu0 0.0
      %427 = vmatpush1.msra.mxu0 0.0
      %428 = vmatprep.subr.mxu0 0.0
      %429 = vmatpush1.msra.mxu0 0.0
      %430 = vmatprep.subr.mxu0 0.0
      %431 = vmatpush1.msra.mxu0 0.0
      %432 = vmatprep.subr.mxu0 0.0
      %433 = vmatpush1.msra.mxu0 0.0
      %434 = vmatprep.subr.mxu0 0.0
      %435 = vmatpush1.msra.mxu0 0.0
      %436 = vmatprep.subr.mxu0 0.0
      %437 = vmatpush1.msra.mxu0 0.0
      %438 = vmatprep.subr.mxu0 0.0
      %439 = vmatpush1.msra.mxu0 0.0
      %440 = vmatprep.subr.mxu0 0.0
      %441 = vmatpush1.msra.mxu0 0.0
      %442 = vmatprep.subr.mxu0 0.0
      %443 = vmatpush1.msra.mxu0 0.0
      %444 = vmatprep.subr.mxu0 0.0
      %445 = vmatpush1.msra.mxu0 0.0
      %446 = vmatprep.subr.mxu0 0.0
      %447 = vmatpush1.msra.mxu0 0.0
      %448 = vmatprep.subr.mxu0 0.0
      %449 = vmatpush1.msra.mxu0 0.0
      %450 = vmatprep.subr.mxu0 0.0
      %451 = vmatpush1.msra.mxu0 0.0
      %452 = vmatprep.subr.mxu0 0.0
      %453 = vmatpush1.msra.mxu0 0.0
      %454 = vmatprep.subr.mxu0 0.0
      %455 = vmatpush1.msra.mxu0 0.0
      %456 = vmatprep.subr.mxu0 0.0
      %457 = vmatpush1.msra.mxu0 0.0
      %458 = vmatprep.subr.mxu0 0.0
      %459 = vmatpush1.msra.mxu0 0.0
      %460 = vmatprep.subr.mxu0 0.0
      %461 = vmatpush1.msra.mxu0 0.0
      %462 = vmatprep.subr.mxu0 0.0
      %463 = vmatpush1.msra.mxu0 0.0
      %464 = vmatprep.subr.mxu0 0.0
      %465 = vmatpush1.msra.mxu0 0.0
      %466 = vmatprep.subr.mxu0 0.0
      %467 = vmatpush1.msra.mxu0 0.0
      %468 = vmatprep.subr.mxu0 0.0
      %469 = vmatpush1.msra.mxu0 0.0
      %470 = vmatprep.subr.mxu0 0.0
      %471 = vmatpush1.msra.mxu0 0.0
      %472 = vmatprep.subr.mxu0 0.0
      %473 = vmatpush1.msra.mxu0 0.0
      %474 = vmatprep.mubr.f32.mxu0 0.0
      %475 = vmatmul.mubr.f32.gmra.mrb[0].mxu0 %v363
      %v476 = vpop.f32.mrb[0].mxu0
      %v477 = vadd.f32 %v284, %v476
      %v478 = vpop.f32.mrb[0].mxu0
      %479 = vmatprep.mubr.f32.mxu0 0.0
      %480 = vmatmul.mubr.f32.gmra.mrb[0].mxu0 %v366
      %v481 = vpop.f32.mrb[0].mxu0
      %v482 = vadd.f32 %v289, %v481
      %v483 = vpop.f32.mrb[0].mxu0
      %484 = vmatprep.mubr.f32.mxu0 0.0
      %485 = vmatmul.mubr.f32.gmra.mrb[0].mxu0 %v369
      %v486 = vpop.f32.mrb[0].mxu0
      %v487 = vadd.f32 %v294, %v486
      %v488 = vpop.f32.mrb[0].mxu0
      %489 = vmatprep.mubr.f32.mxu0 0.0
      %490 = vmatmul.mubr.f32.gmra.mrb[0].mxu0 %v372
      %v491 = vpop.f32.mrb[0].mxu0
      %v492 = vadd.f32 %v299, %v491
      %v493 = vpop.f32.mrb[0].mxu0
      %494 = vmatprep.mubr.f32.mxu0 0.0
      %495 = vmatmul.mubr.f32.gmra.mrb[0].mxu0 %v375
      %v496 = vpop.f32.mrb[0].mxu0
      %v497 = vadd.f32 %v304, %v496
      %v498 = vpop.f32.mrb[0].mxu0
      %499 = vmatprep.mubr.f32.mxu0 0.0
      %500 = vmatmul.mubr.f32.gmra.mrb[0].mxu0 %v378
      %v501 = vpop.f32.mrb[0].mxu0
      %v502 = vadd.f32 %v309, %v501
      %v503 = vpop.f32.mrb[0].mxu0
      %504 = vmatprep.mubr.f32.mxu0 0.0
      %505 = vmatmul.mubr.f32.gmra.mrb[0].mxu0 %v381
      %v506 = vpop.f32.mrb[0].mxu0
      %v507 = vadd.f32 %v314, %v506
      %v508 = vpop.f32.mrb[0].mxu0
      %509 = vmatprep.mubr.f32.mxu0 0.0
      %510 = vmatmul.mubr.f32.gmra.mrb[0].mxu0 %v384
      %v511 = vpop.f32.mrb[0].mxu0
      %v512 = vadd.f32 %v319, %v511
      %v513 = vpop.f32.mrb[0].mxu0
      %514 = vmatprep.mubr.f32.mxu0 0.0
      %515 = vmatmul.mubr.f32.gmra.mrb[0].mxu0 %v387
      %v516 = vpop.f32.mrb[0].mxu0
      %v517 = vadd.f32 %v324, %v516
      %v518 = vpop.f32.mrb[0].mxu0
      %519 = vmatprep.mubr.f32.mxu0 0.0
      %520 = vmatmul.mubr.f32.gmra.mrb[0].mxu0 %v390
      %v521 = vpop.f32.mrb[0].mxu0
      %v522 = vadd.f32 %v329, %v521
      %v523 = vpop.f32.mrb[0].mxu0
      %524 = vmatprep.mubr.f32.mxu0 0.0
      %525 = vmatmul.mubr.f32.gmra.mrb[0].mxu0 %v393
      %v526 = vpop.f32.mrb[0].mxu0
      %v527 = vadd.f32 %v334, %v526
      %v528 = vpop.f32.mrb[0].mxu0
      %529 = vmatprep.mubr.f32.mxu0 0.0
      %530 = vmatmul.mubr.f32.gmra.mrb[0].mxu0 %v396
      %v531 = vpop.f32.mrb[0].mxu0
      %v532 = vadd.f32 %v339, %v531
      %v533 = vpop.f32.mrb[0].mxu0
      %534 = vmatprep.mubr.f32.mxu0 0.0
      %535 = vmatmul.mubr.f32.gmra.mrb[0].mxu0 %v399
      %v536 = vpop.f32.mrb[0].mxu0
      %v537 = vadd.f32 %v344, %v536
      %v538 = vpop.f32.mrb[0].mxu0
      %539 = vmatprep.mubr.f32.mxu0 0.0
      %540 = vmatmul.mubr.f32.gmra.mrb[0].mxu0 %v402
      %v541 = vpop.f32.mrb[0].mxu0
      %v542 = vadd.f32 %v349, %v541
      %v543 = vpop.f32.mrb[0].mxu0
      %544 = vmatprep.mubr.f32.mxu0 0.0
      %545 = vmatmul.mubr.f32.gmra.mrb[0].mxu0 %v405
      %v546 = vpop.f32.mrb[0].mxu0
      %v547 = vadd.f32 %v354, %v546
      %v548 = vpop.f32.mrb[0].mxu0
      %549 = vmatprep.mubr.f32.mxu0 0.0
      %550 = vmatmul.mubr.f32.gmra.mrb[0].mxu0 %v408
      %v551 = vpop.f32.mrb[0].mxu0
      %v552 = vadd.f32 %v359, %v551
      %v553 = vpop.f32.mrb[0].mxu0
      %554 = vdwg.mxu0
      %v555 = vmul.f32 %v477, %v477
      %v556 = vmul.f32 %v482, %v482
      %v557 = vmul.f32 %v487, %v487
      %v558 = vmul.f32 %v492, %v492
      %v559 = vmul.f32 %v497, %v497
      %v560 = vmul.f32 %v502, %v502
      %v561 = vmul.f32 %v507, %v507
      %v562 = vmul.f32 %v512, %v512
      %v563 = vmul.f32 %v517, %v517
      %v564 = vmul.f32 %v522, %v522
      %v565 = vmul.f32 %v527, %v527
      %v566 = vmul.f32 %v532, %v532
      %v567 = vmul.f32 %v537, %v537
      %v568 = vmul.f32 %v542, %v542
      %v569 = vmul.f32 %v547, %v547
      %v570 = vmul.f32 %v552, %v552
      %v571 = vmul.f32 %v477, %v555
      %v572 = vmul.f32 %v482, %v556
      %v573 = vmul.f32 %v487, %v557
      %v574 = vmul.f32 %v492, %v558
      %v575 = vmul.f32 %v497, %v559
      %v576 = vmul.f32 %v502, %v560
      %v577 = vmul.f32 %v507, %v561
      %v578 = vmul.f32 %v512, %v562
      %v579 = vmul.f32 %v517, %v563
      %v580 = vmul.f32 %v522, %v564
      %v581 = vmul.f32 %v527, %v565
      %v582 = vmul.f32 %v532, %v566
      %v583 = vmul.f32 %v537, %v567
      %v584 = vmul.f32 %v542, %v568
      %v585 = vmul.f32 %v547, %v569
      %v586 = vmul.f32 %v552, %v570
      %v587 = vmul.f32 %v571, 0.044715
      %v588 = vmul.f32 %v572, 0.044715
      %v589 = vmul.f32 %v573, 0.044715
      %v590 = vmul.f32 %v574, 0.044715
      %v591 = vmul.f32 %v575, 0.044715
      %v592 = vmul.f32 %v576, 0.044715
      %v593 = vmul.f32 %v577, 0.044715
      %v594 = vmul.f32 %v578, 0.044715
      %v595 = vmul.f32 %v579, 0.044715
      %v596 = vmul.f32 %v580, 0.044715
      %v597 = vmul.f32 %v581, 0.044715
      %v598 = vmul.f32 %v582, 0.044715
      %v599 = vmul.f32 %v583, 0.044715
      %v600 = vmul.f32 %v584, 0.044715
      %v601 = vmul.f32 %v585, 0.044715
      %v602 = vmul.f32 %v586, 0.044715
      %v603 = vadd.f32 %v477, %v587
      %v604 = vadd.f32 %v482, %v588
      %v605 = vadd.f32 %v487, %v589
      %v606 = vadd.f32 %v492, %v590
      %v607 = vadd.f32 %v497, %v591
      %v608 = vadd.f32 %v502, %v592
      %v609 = vadd.f32 %v507, %v593
      %v610 = vadd.f32 %v512, %v594
      %v611 = vadd.f32 %v517, %v595
      %v612 = vadd.f32 %v522, %v596
      %v613 = vadd.f32 %v527, %v597
      %v614 = vadd.f32 %v532, %v598
      %v615 = vadd.f32 %v537, %v599
      %v616 = vadd.f32 %v542, %v600
      %v617 = vadd.f32 %v547, %v601
      %v618 = vadd.f32 %v552, %v602
      %v619 = vmul.f32 %v603, 0.7978846
      %v620 = vmul.f32 %v604, 0.7978846
      %v621 = vmul.f32 %v605, 0.7978846
      %v622 = vmul.f32 %v606, 0.7978846
      %v623 = vmul.f32 %v607, 0.7978846
      %v624 = vmul.f32 %v608, 0.7978846
      %v625 = vmul.f32 %v609, 0.7978846
      %v626 = vmul.f32 %v610, 0.7978846
      %v627 = vmul.f32 %v611, 0.7978846
      %v628 = vmul.f32 %v612, 0.7978846
      %v629 = vmul.f32 %v613, 0.7978846
      %v630 = vmul.f32 %v614, 0.7978846
      %v631 = vmul.f32 %v615, 0.7978846
      %v632 = vmul.f32 %v616, 0.7978846
      %v633 = vmul.f32 %v617, 0.7978846
      %v634 = vmul.f32 %v618, 0.7978846
      %v635 = vtanh.pop %v619
      %v636 = vtanh.pop %v620
      %v637 = vtanh.pop %v621
      %v638 = vtanh.pop %v622
      %v639 = vtanh.pop %v623
      %v640 = vtanh.pop %v624
      %v641 = vtanh.pop %v625
      %v642 = vtanh.pop %v626
      %v643 = vtanh.pop %v627
      %v644 = vtanh.pop %v628
      %v645 = vtanh.pop %v629
      %v646 = vtanh.pop %v630
      %v647 = vtanh.pop %v631
      %v648 = vtanh.pop %v632
      %v649 = vtanh.pop %v633
      %v650 = vtanh.pop %v634
      %v651 = vadd.f32 %v635, 1.0
      %v652 = vadd.f32 %v636, 1.0
      %v653 = vadd.f32 %v637, 1.0
      %v654 = vadd.f32 %v638, 1.0
      %v655 = vadd.f32 %v639, 1.0
      %v656 = vadd.f32 %v640, 1.0
      %v657 = vadd.f32 %v641, 1.0
      %v658 = vadd.f32 %v642, 1.0
      %v659 = vadd.f32 %v643, 1.0
      %v660 = vadd.f32 %v644, 1.0
      %v661 = vadd.f32 %v645, 1.0
      %v662 = vadd.f32 %v646, 1.0
      %v663 = vadd.f32 %v647, 1.0
      %v664 = vadd.f32 %v648, 1.0
      %v665 = vadd.f32 %v649, 1.0
      %v666 = vadd.f32 %v650, 1.0
      %v667 = vmul.f32 %v651, 0.5
      %v668 = vmul.f32 %v652, 0.5
      %v669 = vmul.f32 %v653, 0.5
      %v670 = vmul.f32 %v654, 0.5
      %v671 = vmul.f32 %v655, 0.5
      %v672 = vmul.f32 %v656, 0.5
      %v673 = vmul.f32 %v657, 0.5
      %v674 = vmul.f32 %v658, 0.5
      %v675 = vmul.f32 %v659, 0.5
      %v676 = vmul.f32 %v660, 0.5
      %v677 = vmul.f32 %v661, 0.5
      %v678 = vmul.f32 %v662, 0.5
      %v679 = vmul.f32 %v663, 0.5
      %v680 = vmul.f32 %v664, 0.5
      %v681 = vmul.f32 %v665, 0.5
      %v682 = vmul.f32 %v666, 0.5
      %v683 = vmul.f32 %v477, %v667
      %v684 = vmul.f32 %v482, %v668
      %v685 = vmul.f32 %v487, %v669
      %v686 = vmul.f32 %v492, %v670
      %v687 = vmul.f32 %v497, %v671
      %v688 = vmul.f32 %v502, %v672
      %v689 = vmul.f32 %v507, %v673
      %v690 = vmul.f32 %v512, %v674
      %v691 = vmul.f32 %v517, %v675
      %v692 = vmul.f32 %v522, %v676
      %v693 = vmul.f32 %v527, %v677
      %v694 = vmul.f32 %v532, %v678
      %v695 = vmul.f32 %v537, %v679
      %v696 = vmul.f32 %v542, %v680
      %v697 = vmul.f32 %v547, %v681
      %v698 = vmul.f32 %v552, %v682
      %v699 = vld [vmem:[%s3] sm:$0x1]
      %700 = vmatprep.subr.mxu0 0.0
      %701 = vmatpush1.msra.mxu0 %v683
      %702 = vmatprep.subr.mxu0 0.0
      %703 = vmatpush1.msra.mxu0 %v684
      %704 = vmatprep.subr.mxu0 0.0
      %705 = vmatpush1.msra.mxu0 %v685
      %706 = vmatprep.subr.mxu0 0.0
      %707 = vmatpush1.msra.mxu0 %v686
      %708 = vmatprep.subr.mxu0 0.0
      %709 = vmatpush1.msra.mxu0 %v687
      %710 = vmatprep.subr.mxu0 0.0
      %711 = vmatpush1.msra.mxu0 %v688
      %712 = vmatprep.subr.mxu0 0.0
      %713 = vmatpush1.msra.mxu0 %v689
      %714 = vmatprep.subr.mxu0 0.0
      %715 = vmatpush1.msra.mxu0 %v690
      %716 = vmatprep.subr.mxu0 0.0
      %717 = vmatpush1.msra.mxu0 %v691
      %718 = vmatprep.subr.mxu0 0.0
      %719 = vmatpush1.msra.mxu0 %v692
      %720 = vmatprep.subr.mxu0 0.0
      %721 = vmatpush1.msra.mxu0 %v693
      %722 = vmatprep.subr.mxu0 0.0
      %723 = vmatpush1.msra.mxu0 %v694
      %724 = vmatprep.subr.mxu0 0.0
      %725 = vmatpush1.msra.mxu0 %v695
      %726 = vmatprep.subr.mxu0 0.0
      %727 = vmatpush1.msra.mxu0 %v696
      %728 = vmatprep.subr.mxu0 0.0
      %729 = vmatpush1.msra.mxu0 %v697
      %730 = vmatprep.subr.mxu0 0.0
      %731 = vmatpush1.msra.mxu0 %v698
      %732 = vmatprep.subr.mxu0 0.0
      %733 = vmatpush1.msra.mxu0 0.0
      %734 = vmatprep.subr.mxu0 0.0
      %735 = vmatpush1.msra.mxu0 0.0
      %736 = vmatprep.subr.mxu0 0.0
      %737 = vmatpush1.msra.mxu0 0.0
      %738 = vmatprep.subr.mxu0 0.0
      %739 = vmatpush1.msra.mxu0 0.0
      %740 = vmatprep.subr.mxu0 0.0
      %741 = vmatpush1.msra.mxu0 0.0
      %742 = vmatprep.subr.mxu0 0.0
      %743 = vmatpush1.msra.mxu0 0.0
      %744 = vmatprep.subr.mxu0 0.0
      %745 = vmatpush1.msra.mxu0 0.0
      %746 = vmatprep.subr.mxu0 0.0
      %747 = vmatpush1.msra.mxu0 0.0
      %748 = vmatprep.subr.mxu0 0.0
      %749 = vmatpush1.msra.mxu0 0.0
      %750 = vmatprep.subr.mxu0 0.0
      %751 = vmatpush1.msra.mxu0 0.0
      %752 = vmatprep.subr.mxu0 0.0
      %753 = vmatpush1.msra.mxu0 0.0
      %754 = vmatprep.subr.mxu0 0.0
      %755 = vmatpush1.msra.mxu0 0.0
      %756 = vmatprep.subr.mxu0 0.0
      %757 = vmatpush1.msra.mxu0 0.0
      %758 = vmatprep.subr.mxu0 0.0
      %759 = vmatpush1.msra.mxu0 0.0
      %760 = vmatprep.subr.mxu0 0.0
      %761 = vmatpush1.msra.mxu0 0.0
      %762 = vmatprep.subr.mxu0 0.0
      %763 = vmatpush1.msra.mxu0 0.0
      %764 = vmatprep.mubr.f32.mxu0 0.0
      %765 = vmatmul.mubr.f32.gmra.mrb[0].mxu0 %v699
      %v766 = vpop.f32.mrb[0].mxu0
      %v767 = vadd.f32 0.0, %v766
      %v768 = vpop.f32.mrb[0].mxu0
      %769 = vdwg.mxu0
      %770 = vst [vmem:[%s244] sm:$0x1] %v767
      %p771 = scmp.lt.s32.totalorder %s19, 1
      %s772 = scalar_select %p771, %s19, 1
      %p773 = scmp.lt.s32.totalorder %s20, 0
      %s774 = scalar_select %p773, %s20, 0
      %s775 = sadd.s32 %s774, %s772
      %s776 = scalar_lea.vmem %s4, %s775
      // Predicated region
      $region37: #{value_guide_forward.1} parent=35 // pred_check
        %p777 = pneg %p143
      $region38: #{value_guide_forward.1} parent=35 // pred_check_branch
        %779 = sbr.rel (%p777) target = $region40
      $region39: #{value_guide_forward.1} parent=35 // pred_region
        _
      $region40: #{value_guide_forward.1} parent=35 // pred_fallthru
        _
    $region36: #{value_guide_forward.1} parent=5 // pred_fallthru
      _
    %p780 = scmp.le.s32.totalorder 2, %s10
    // Predicated region
    $region41: #{value_guide_forward.1} parent=5 // pred_check
      %p781 = pneg %p780
    $region42: #{value_guide_forward.1} parent=5 // pred_check_branch
      %783 = sbr.rel (%p781) target = $region44
    $region43: #{value_guide_forward.1} parent=5 // pred_region
      %s784 = ssub.s32 %s10, 2
      // Predicated region
      $region45: #{value_guide_forward.1} parent=43 // pred_check
        %p785 = pneg %p149
      $region46: #{value_guide_forward.1} parent=43 // pred_check_branch
        %787 = sbr.rel (%p785) target = $region48
      $region47: #{value_guide_forward.1} parent=43 // pred_region
        %p788 = scmp.lt.s32.totalorder %s21, 1
        %s789 = scalar_select %p788, %s21, 1
        %p790 = scmp.lt.s32.totalorder %s22, 0
        %s791 = scalar_select %p790, %s22, 0
        %s792 = sadd.s32 %s791, %s789
        %s793 = scalar_lea.vmem %s4, %s792
      $region48: #{value_guide_forward.1} parent=43 // pred_fallthru
        _
    $region44: #{value_guide_forward.1} parent=5 // pred_fallthru
      _
  $region6: #{value_guide_forward.1} parent=0 // loop_footer
    %s14 = sadd.s32 1, %s10
  $region7: #{value_guide_forward.1} parent=0 // loop_footer_branch
    %9 = sbr.rel target = $region3
  $region8: #{value_guide_forward.1} parent=0 // loop_exit
    _

</llo_original>
